<compile_context>
chip_gen: v7x
topology: tpu7x:2x2x1
jax: 0.10.0
libtpu: 0.0.40
codegen_flags: <defaults>
</compile_context>

<pallas_src>
import functools

import jax
import jax.numpy as jnp
from jax.experimental import pallas as pl
from jax.experimental.pallas import tpu as pltpu


def _round_up(a, b):
    return (a + b - 1) // b * b


# Conservative working-set target (bytes). Stays well inside every generation's
# VMEM (v7x physical is 64 MiB); vmem_limit_bytes below gives a little headroom.
_VMEM_BUDGET = 28 << 20
_VMEM_LIMIT = 40 << 20


def _choose_tiles(m, dp, dip, block_rows):
    """Pick (tm, tk): row tile and inner-dim chunk that fit the VMEM budget."""
    tm = min(block_rows, _round_up(m, 16))
    tm = _round_up(tm, 16)                       # bf16 sublane packing

    def fixed_bytes(t):
        # Double-buffered bf16 x tile + double-buffered f32 out tile + f32 acc.
        return 2 * t * dp * 2 + 2 * t * dp * 4 + t * dp * 4

    # Shrink the row tile until its tk-independent working set uses at most
    # half the budget, leaving the rest for streamed weight chunks.
    while tm > 16 and fixed_bytes(tm) > _VMEM_BUDGET // 2:
        tm = max(_round_up(tm // 2, 16), 16)

    # Per inner-dim column: W1 column + W2 row (bf16, double-buffered) + b1 (f32, x2).
    per_col = 2 * 2 * (2 * dp) + 2 * 4
    avail = max(_VMEM_BUDGET - fixed_bytes(tm), per_col * 128)
    tk = (avail // per_col) // 128 * 128
    tk = max(min(tk, dip), 128)
    return tm, tk


def _ffn_kernel(x_ref, w1_ref, b1_ref, w2_ref, b2_ref, o_ref, acc_ref):
    # Grid: (row_tiles, inner_chunks); axis 1 reduces over the hidden dimension.
    k = pl.program_id(1)

    # First matmul: bf16 on the MXU, f32 accumulation; bias + ReLU in f32 (VPU).
    h = jnp.dot(x_ref[...], w1_ref[...], preferred_element_type=jnp.float32)
    h = jnp.maximum(h + b1_ref[...], 0.0)
    # TODO(synk): nn.Dropout is identity in eval mode; PyTorch's training-time
    # RNG stream is not reproducible here, so dropout is treated as identity.

    # Second matmul: this inner-dim chunk's contribution to the output tile.
    contrib = jnp.dot(h.astype(w2_ref.dtype), w2_ref[...],
                      preferred_element_type=jnp.float32)

    @pl.when(k == 0)
    def _():
        acc_ref[...] = contrib          # direct write: no zero-init pass

    @pl.when(k != 0)
    def _():
        acc_ref[...] += contrib

    @pl.when(k == pl.num_programs(1) - 1)
    def _():
        o_ref[...] = (acc_ref[...] + b2_ref[...]).astype(o_ref.dtype)


@functools.partial(jax.jit, static_argnames=("block_rows",))
def feed_forward(x, w1, b1, w2, b2, *, block_rows=512):
    """x: (batch, seq, inp_dim) float32 -> (batch, seq, inp_dim) float32."""
    batch, seq, inp_dim = x.shape
    inner_dim = w1.shape[1]
    m = batch * seq

    # Lane/sublane-aligned padded dims and tile sizes.
    dp = _round_up(inp_dim, 128)                 # feature dim -> 128 lanes
    dip = _round_up(inner_dim, 128)              # hidden dim -> 128 lanes

    tm, tk = _choose_tiles(m, dp, dip, block_rows)
    mp = _round_up(m, tm)
    num_k = pl.cdiv(dip, tk)
    dip = num_k * tk                             # pad hidden dim to chunk multiple

    # Pad + cast (bf16 for MXU operands, f32 for biases). Zero-padding is exact:
    # padded hidden columns produce relu(0 + 0) = 0 and contribute nothing.
    x2 = x.reshape(m, inp_dim)
    xp = jnp.pad(x2.astype(jnp.bfloat16), ((0, mp - m), (0, dp - inp_dim)))
    w1p = jnp.pad(w1.astype(jnp.bfloat16), ((0, dp - inp_dim), (0, dip - inner_dim)))
    b1p = jnp.pad(b1.astype(jnp.float32), ((0, 0), (0, dip - inner_dim)))
    w2p = jnp.pad(w2.astype(jnp.bfloat16), ((0, dip - inner_dim), (0, dp - inp_dim)))
    b2p = jnp.pad(b2.astype(jnp.float32), ((0, 0), (0, dp - inp_dim)))

    num_row_tiles = mp // tm
    flops = 2 * mp * dp * dip * 2                # two matmuls
    bytes_accessed = (xp.size * 2                                   # x (bf16)
                      + num_row_tiles * (w1p.size + w2p.size) * 2   # weights re-streamed
                      + b1p.size * 4 + b2p.size * 4
                      + mp * dp * 4)                                # output (f32)

    out = pl.pallas_call(
        _ffn_kernel,
        out_shape=jax.ShapeDtypeStruct((mp, dp), jnp.float32),
        grid_spec=pltpu.PrefetchScalarGridSpec(
            num_scalar_prefetch=0,
            grid=(num_row_tiles, num_k),
            in_specs=[
                pl.BlockSpec((tm, dp), lambda i, k: (i, 0)),   # x row tile (bf16)
                pl.BlockSpec((dp, tk), lambda i, k: (0, k)),   # W1 chunk (bf16)
                pl.BlockSpec((1, tk), lambda i, k: (0, k)),    # b1 chunk (f32)
                pl.BlockSpec((tk, dp), lambda i, k: (k, 0)),   # W2 chunk (bf16)
                pl.BlockSpec((1, dp), lambda i, k: (0, 0)),    # b2 (f32, resident)
            ],
            out_specs=pl.BlockSpec((tm, dp), lambda i, k: (i, 0)),
            scratch_shapes=[pltpu.VMEM((tm, dp), jnp.float32)],
        ),
        compiler_params=pltpu.CompilerParams(
            dimension_semantics=("parallel", "arbitrary"),
            vmem_limit_bytes=_VMEM_LIMIT,
        ),
        cost_estimate=pl.CostEstimate(
            flops=flops, transcendentals=0, bytes_accessed=bytes_accessed),
    )(xp, w1p, b1p, w2p, b2p)

    return out[:m, :inp_dim].astype(x.dtype).reshape(batch, seq, inp_dim)


def init_feed_forward_params(key, inp_dim, inner_dim, dtype=jnp.float32):
    """Deterministic init mirroring nn.Linear default: U(-1/sqrt(fan_in), 1/sqrt(fan_in))."""
    k1, k2, k3, k4 = jax.random.split(key, 4)
    bound1 = 1.0 / (inp_dim ** 0.5)
    bound2 = 1.0 / (inner_dim ** 0.5)
    # Stored already transposed vs. PyTorch layout (out_features, in_features).
    w1 = jax.random.uniform(k1, (inp_dim, inner_dim), dtype, -bound1, bound1)
    b1 = jax.random.uniform(k2, (1, inner_dim), dtype, -bound1, bound1)
    w2 = jax.random.uniform(k3, (inner_dim, inp_dim), dtype, -bound2, bound2)
    b2 = jax.random.uniform(k4, (1, inp_dim), dtype, -bound2, bound2)
    return w1, b1, w2, b2


if __name__ == "__main__":
    key = jax.random.PRNGKey(0)
    kx, kp = jax.random.split(key)

    batch, seq, inp_dim, inner_dim = 2, 8, 32, 64
    x = jax.random.normal(kx, (batch, seq, inp_dim), jnp.float32)
    w1, b1, w2, b2 = init_feed_forward_params(kp, inp_dim, inner_dim)

    out = feed_forward(x, w1, b1, w2, b2)
    out = jax.block_until_ready(out)

    # Reference in plain JAX f32 (dropout = identity, eval semantics).
    # Tolerance relaxed because the kernel uses bf16 MXU inputs (f32 accumulation).
    ref = jnp.maximum(x.reshape(-1, inp_dim) @ w1 + b1, 0.0) @ w2 + b2
    ref = ref.reshape(batch, seq, inp_dim)
    assert out.shape == (batch, seq, inp_dim)
    assert jnp.allclose(out, ref, atol=2e-2, rtol=2e-2), \
        float(jnp.max(jnp.abs(out - ref)))

    print("KERNEL_OK")
</pallas_src>

<mosaic_0001>
module attributes {stable_mosaic.version = 11 : i64} {
  func.func @_ffn_kernel(%arg0: i32, %arg1: i32, %arg2: memref<16x128xbf16, #tpu.memory_space<vmem>>, %arg3: memref<128x128xbf16, #tpu.memory_space<vmem>>, %arg4: memref<1x128xf32, #tpu.memory_space<vmem>>, %arg5: memref<128x128xbf16, #tpu.memory_space<vmem>>, %arg6: memref<1x128xf32, #tpu.memory_space<vmem>>, %arg7: memref<16x128xf32, #tpu.memory_space<vmem>>, %arg8: memref<16x128xf32, #tpu.memory_space<vmem>>) attributes {dimension_semantics = [#tpu.dimension_semantics<parallel>, #tpu.dimension_semantics<arbitrary>], iteration_bounds = array<i64: 1, 1>, scalar_prefetch = 0 : i64, scratch_operands = 1 : i64, tpu.core_type = #tpu.core_type<tc>, window_params = [{transform_indices = @transform_0, window_bounds = array<i64: 16, 128>}, {transform_indices = @transform_1, window_bounds = array<i64: 128, 128>}, {transform_indices = @transform_2, window_bounds = array<i64: 1, 128>}, {transform_indices = @transform_3, window_bounds = array<i64: 128, 128>}, {pipeline_mode = #tpu.pipeline_mode<synchronous>, transform_indices = @transform_4, window_bounds = array<i64: 1, 128>}, {transform_indices = @transform_5, window_bounds = array<i64: 16, 128>}]} {
    %c0 = arith.constant 0 : index
    %c0_0 = arith.constant 0 : index
    %0 = vector.load %arg2[%c0, %c0_0] : memref<16x128xbf16, #tpu.memory_space<vmem>>, vector<16x128xbf16>
    %c0_1 = arith.constant 0 : index
    %c0_2 = arith.constant 0 : index
    %1 = vector.load %arg3[%c0_1, %c0_2] : memref<128x128xbf16, #tpu.memory_space<vmem>>, vector<128x128xbf16>
    %cst = arith.constant dense<0.000000e+00> : vector<16x128xf32>
    %2 = tpu.matmul %0, %1, %cst {dimension_numbers = #tpu.dot_dimension_numbers<[1], [0], [0], [1], [0, 0, 1, 1], [], []>} : vector<16x128xbf16>, vector<128x128xbf16>, vector<16x128xf32> -> vector<16x128xf32>
    %c0_3 = arith.constant 0 : index
    %c0_4 = arith.constant 0 : index
    %3 = vector.load %arg4[%c0_3, %c0_4] : memref<1x128xf32, #tpu.memory_space<vmem>>, vector<1x128xf32>
    %4 = vector.broadcast %3 : vector<1x128xf32> to vector<16x128xf32>
    %5 = arith.addf %2, %4 : vector<16x128xf32>
    %cst_5 = arith.constant 0.000000e+00 : f32
    %6 = vector.broadcast %cst_5 : f32 to vector<16x128xf32>
    %7 = arith.maximumf %5, %6 : vector<16x128xf32>
    %8 = arith.truncf %7 : vector<16x128xf32> to vector<16x128xbf16>
    %c0_6 = arith.constant 0 : index
    %c0_7 = arith.constant 0 : index
    %9 = vector.load %arg5[%c0_6, %c0_7] : memref<128x128xbf16, #tpu.memory_space<vmem>>, vector<128x128xbf16>
    %cst_8 = arith.constant dense<0.000000e+00> : vector<16x128xf32>
    %10 = tpu.matmul %8, %9, %cst_8 {dimension_numbers = #tpu.dot_dimension_numbers<[1], [0], [0], [1], [0, 0, 1, 1], [], []>} : vector<16x128xbf16>, vector<128x128xbf16>, vector<16x128xf32> -> vector<16x128xf32>
    %c0_i32 = arith.constant 0 : i32
    %11 = arith.cmpi eq, %arg1, %c0_i32 : i32
    %12 = arith.extui %11 : i1 to i32
    %c0_i32_9 = arith.constant 0 : i32
    %13 = arith.cmpi ne, %12, %c0_i32_9 : i32
    scf.if %13 {
      %c0_14 = arith.constant 0 : index
      %c0_15 = arith.constant 0 : index
      %20 = vector.load %arg8[%c0_14, %c0_15] : memref<16x128xf32, #tpu.memory_space<vmem>>, vector<16x128xf32>
      tpu.vector_store %arg8[%c0_14, %c0_15], %10 {strides = array<i32>} : memref<16x128xf32, #tpu.memory_space<vmem>>, vector<16x128xf32>,
    } else {
    }
    %c0_i32_10 = arith.constant 0 : i32
    %14 = arith.cmpi ne, %arg1, %c0_i32_10 : i32
    %15 = arith.extui %14 : i1 to i32
    %c0_i32_11 = arith.constant 0 : i32
    %16 = arith.cmpi ne, %15, %c0_i32_11 : i32
    scf.if %16 {
      %c0_14 = arith.constant 0 : index
      %c0_15 = arith.constant 0 : index
      %20 = vector.load %arg8[%c0_14, %c0_15] : memref<16x128xf32, #tpu.memory_space<vmem>>, vector<16x128xf32>
      %21 = arith.addf %20, %10 : vector<16x128xf32>
      %c0_16 = arith.constant 0 : index
      %c0_17 = arith.constant 0 : index
      %22 = vector.load %arg8[%c0_16, %c0_17] : memref<16x128xf32, #tpu.memory_space<vmem>>, vector<16x128xf32>
      tpu.vector_store %arg8[%c0_16, %c0_17], %21 {strides = array<i32>} : memref<16x128xf32, #tpu.memory_space<vmem>>, vector<16x128xf32>,
    } else {
    }
    %c0_i32_12 = arith.constant 0 : i32
    %17 = arith.cmpi eq, %arg1, %c0_i32_12 : i32
    %18 = arith.extui %17 : i1 to i32
    %c0_i32_13 = arith.constant 0 : i32
    %19 = arith.cmpi ne, %18, %c0_i32_13 : i32
    scf.if %19 {
      %c0_14 = arith.constant 0 : index
      %c0_15 = arith.constant 0 : index
      %20 = vector.load %arg8[%c0_14, %c0_15] : memref<16x128xf32, #tpu.memory_space<vmem>>, vector<16x128xf32>
      %c0_16 = arith.constant 0 : index
      %c0_17 = arith.constant 0 : index
      %21 = vector.load %arg6[%c0_16, %c0_17] : memref<1x128xf32, #tpu.memory_space<vmem>>, vector<1x128xf32>
      %22 = vector.broadcast %21 : vector<1x128xf32> to vector<16x128xf32>
      %23 = arith.addf %20, %22 : vector<16x128xf32>
      %c0_18 = arith.constant 0 : index
      %c0_19 = arith.constant 0 : index
      %24 = vector.load %arg7[%c0_18, %c0_19] : memref<16x128xf32, #tpu.memory_space<vmem>>, vector<16x128xf32>
      tpu.vector_store %arg7[%c0_18, %c0_19], %23 {strides = array<i32>} : memref<16x128xf32, #tpu.memory_space<vmem>>, vector<16x128xf32>,
    } else {
    }
    return
  }
  func.func @transform_0(%arg0: i32, %arg1: i32) -> (i32, i32) {
    %c0_i32 = arith.constant 0 : i32
    %c0_i32_0 = arith.constant 0 : i32
    return %arg0, %c0_i32 : i32, i32
  }
  func.func @transform_1(%arg0: i32, %arg1: i32) -> (i32, i32) {
    %c0_i32 = arith.constant 0 : i32
    %c0_i32_0 = arith.constant 0 : i32
    return %c0_i32, %arg1 : i32, i32
  }
  func.func @transform_2(%arg0: i32, %arg1: i32) -> (i32, i32) {
    %c0_i32 = arith.constant 0 : i32
    %c0_i32_0 = arith.constant 0 : i32
    return %c0_i32, %arg1 : i32, i32
  }
  func.func @transform_3(%arg0: i32, %arg1: i32) -> (i32, i32) {
    %c0_i32 = arith.constant 0 : i32
    %c0_i32_0 = arith.constant 0 : i32
    return %arg1, %c0_i32 : i32, i32
  }
  func.func @transform_4(%arg0: i32, %arg1: i32) -> (i32, i32) {
    %c0_i32 = arith.constant 0 : i32
    %c0_i32_0 = arith.constant 0 : i32
    %c0_i32_1 = arith.constant 0 : i32
    return %c0_i32, %c0_i32_0 : i32, i32
  }
  func.func @transform_5(%arg0: i32, %arg1: i32) -> (i32, i32) {
    %c0_i32 = arith.constant 0 : i32
    %c0_i32_0 = arith.constant 0 : i32
    return %arg0, %c0_i32 : i32, i32
  }
}

</mosaic_0001>

<llo_original>
// kernel: feed_forward.1
$region0: #{feed_forward.1}
  #allocation0 [shape = 'u32[]', space=smem, size = 0x4, offset = 0x4, fixed_abs, tag = 'smem constant byte address 0x4 - core index']
  #allocation1 [shape = 'u32[144,128]{1,0:T(1,128)}', space=vmem, size = 0x12000, scoped, tag = 'internal scratch']
  #allocation2 [shape = 'f32[16,128]{1,0:T(8,128)}', space=vmem, size = 0x2000, scoped, tag = 'scratch operand']
  %s0 = inlined_call_operand.vmem [shape: bf16[16,128], index: 0, kind: input, shape index: {}]
  %s1 = inlined_call_operand.vmem [shape: bf16[128,128], index: 1, kind: input, shape index: {}]
  %s2 = inlined_call_operand.vmem [shape: f32[1,128], index: 2, kind: input, shape index: {}]
  %s3 = inlined_call_operand.vmem [shape: bf16[128,128], index: 3, kind: input, shape index: {}]
  %s4 = inlined_call_operand.vmem [shape: f32[1,128], index: 4, kind: input, shape index: {}]
  %s5 = inlined_call_operand.vmem [shape: f32[16,128], index: 5, kind: output, shape index: {}]
  %s6 = sld [smem:[#allocation0]]
  $region42: #{feed_forward.1} parent=0
    _
  %s8 = ssub.s32 1, %s6
  %s9 = scalar_select 0, %s8, %s6
  // Predicated region
  $region2: #{feed_forward.1} parent=0 // pred_check
    _
  $region3: #{feed_forward.1} parent=0 // pred_check_branch
    %11 = sbr.rel (0) target = $region5
  $region4: #{feed_forward.1} parent=0 // pred_region
    _
  $region5: #{feed_forward.1} parent=0 // pred_fallthru
    _
  // Predicated region
  $region6: #{feed_forward.1} parent=0 // pred_check
    _
  $region7: #{feed_forward.1} parent=0 // pred_check_branch
    %13 = sbr.rel (0) target = $region9
  $region8: #{feed_forward.1} parent=0 // pred_region
    _
  $region9: #{feed_forward.1} parent=0 // pred_fallthru
    _
  // Predicated region
  $region10: #{feed_forward.1} parent=0 // pred_check
    _
  $region11: #{feed_forward.1} parent=0 // pred_check_branch
    %15 = sbr.rel (0) target = $region13
  $region12: #{feed_forward.1} parent=0 // pred_region
    _
  $region13: #{feed_forward.1} parent=0 // pred_fallthru
    _
  // Predicated region
  $region14: #{feed_forward.1} parent=0 // pred_check
    _
  $region15: #{feed_forward.1} parent=0 // pred_check_branch
    %17 = sbr.rel (0) target = $region17
  $region16: #{feed_forward.1} parent=0 // pred_region
    _
  $region17: #{feed_forward.1} parent=0 // pred_fallthru
    _
  // Predicated region
  $region18: #{feed_forward.1} parent=0 // pred_check
    _
  $region19: #{feed_forward.1} parent=0 // pred_check_branch
    %19 = sbr.rel (0) target = $region21
  $region20: #{feed_forward.1} parent=0 // pred_region
    _
  $region21: #{feed_forward.1} parent=0 // pred_fallthru
    _
  %v21 = vld [vmem:[%s0] sm:$0xf]
  %v22 = vld [vmem:[%s0 + $0x4] sm:$0xf]
  %v23 = vld [vmem:[%s1] sm:$0xf]
  %v24 = vld [vmem:[%s1 + $0x4] sm:$0xf]
  %v25 = vld [vmem:[%s1 + $0x8] sm:$0xf]
  %v26 = vld [vmem:[%s1 + $0xc] sm:$0xf]
  %v27 = vld [vmem:[%s1 + $0x10] sm:$0xf]
  %v28 = vld [vmem:[%s1 + $0x14] sm:$0xf]
  %v29 = vld [vmem:[%s1 + $0x18] sm:$0xf]
  %v30 = vld [vmem:[%s1 + $0x1c] sm:$0xf]
  %v31 = vld [vmem:[%s1 + $0x20] sm:$0xf]
  %v32 = vld [vmem:[%s1 + $0x24] sm:$0xf]
  %v33 = vld [vmem:[%s1 + $0x28] sm:$0xf]
  %v34 = vld [vmem:[%s1 + $0x2c] sm:$0xf]
  %v35 = vld [vmem:[%s1 + $0x30] sm:$0xf]
  %v36 = vld [vmem:[%s1 + $0x34] sm:$0xf]
  %v37 = vld [vmem:[%s1 + $0x38] sm:$0xf]
  %v38 = vld [vmem:[%s1 + $0x3c] sm:$0xf]
  %v39 = vld [vmem:[%s2] sm:$0x1]
  %v41 = vlaneseq
  %v42 = vshrl.u32 %v41, 7
  %v43 = vsub.s32 0, %v42
  %v44 = vrot.slane %v39, %v43
  %v48 = vunpack.c.l.b16 %v21
  %v49 = vunpack.c.l.b16 %v22
  %v50 = vpack.c.b16 %v49, %v48
  %v68 = vunpack.c.l.b16 %v23
  %v69 = vunpack.c.l.b16 %v24
  %v70 = vunpack.c.l.b16 %v25
  %v71 = vunpack.c.l.b16 %v26
  %v72 = vunpack.c.l.b16 %v27
  %v73 = vunpack.c.l.b16 %v28
  %v74 = vunpack.c.l.b16 %v29
  %v75 = vunpack.c.l.b16 %v30
  %v76 = vunpack.c.l.b16 %v31
  %v77 = vunpack.c.l.b16 %v32
  %v78 = vunpack.c.l.b16 %v33
  %v79 = vunpack.c.l.b16 %v34
  %v80 = vunpack.c.l.b16 %v35
  %v81 = vunpack.c.l.b16 %v36
  %v82 = vunpack.c.l.b16 %v37
  %v83 = vunpack.c.l.b16 %v38
  %v84 = vpack.c.b16 %v69, %v68
  %v85 = vpack.c.b16 %v71, %v70
  %v86 = vpack.c.b16 %v73, %v72
  %v87 = vpack.c.b16 %v75, %v74
  %v88 = vpack.c.b16 %v77, %v76
  %v89 = vpack.c.b16 %v79, %v78
  %v90 = vpack.c.b16 %v81, %v80
  %v91 = vpack.c.b16 %v83, %v82
  %100 = vmatprep.subr.bf16.mxu0 0
  %101 = vmatpush1.bf16.msra.mxu0 %v84
  %102 = vmatprep.subr.bf16.mxu0 0
  %103 = vmatpush1.bf16.msra.mxu0 %v85
  %104 = vmatprep.subr.bf16.mxu0 0
  %105 = vmatpush1.bf16.msra.mxu0 %v86
  %106 = vmatprep.subr.bf16.mxu0 0
  %107 = vmatpush1.bf16.msra.mxu0 %v87
  %108 = vmatprep.subr.bf16.mxu0 0
  %109 = vmatpush1.bf16.msra.mxu0 %v88
  %110 = vmatprep.subr.bf16.mxu0 0
  %111 = vmatpush1.bf16.msra.mxu0 %v89
  %112 = vmatprep.subr.bf16.mxu0 0
  %113 = vmatpush1.bf16.msra.mxu0 %v90
  %114 = vmatprep.subr.bf16.mxu0 0
  %115 = vmatpush1.bf16.msra.mxu0 %v91
  %116 = vmatprep.subr.bf16.mxu0 0
  %117 = vmatpush1.bf16.msra.mxu0 0
  %118 = vmatprep.subr.bf16.mxu0 0
  %119 = vmatpush1.bf16.msra.mxu0 0
  %120 = vmatprep.subr.bf16.mxu0 0
  %121 = vmatpush1.bf16.msra.mxu0 0
  %122 = vmatprep.subr.bf16.mxu0 0
  %123 = vmatpush1.bf16.msra.mxu0 0
  %124 = vmatprep.subr.bf16.mxu0 0
  %125 = vmatpush1.bf16.msra.mxu0 0
  %126 = vmatprep.subr.bf16.mxu0 0
  %127 = vmatpush1.bf16.msra.mxu0 0
  %128 = vmatprep.subr.bf16.mxu0 0
  %129 = vmatpush1.bf16.msra.mxu0 0
  %130 = vmatprep.subr.bf16.mxu0 0
  %131 = vmatpush1.bf16.msra.mxu0 0
  %132 = vmatprep.mubr.bf16.mxu0 0
  %133 = vmatmul.mubr.bf16.gmra.mrb[0].mxu0 %v50
  %v134 = vpop.f32.mrb[0].mxu0
  %v135 = vadd.f32 %v44, %v134
  %v136 = vpop.f32.mrb[0].mxu0
  %v137 = vpop.f32.mrb[0].mxu0
  %v138 = vadd.f32 %v44, %v137
  %v139 = vpop.f32.mrb[0].mxu0
  %140 = vdwg.mxu0
  %v141 = vmax.f32 %v135, 0.0
  %v142 = vmax.f32 %v138, 0.0
  %v143 = vpack.c.bf16 %v142, %v141
  %v144 = vld [vmem:[%s3] sm:$0xf]
  %v145 = vld [vmem:[%s3 + $0x4] sm:$0xf]
  %v146 = vld [vmem:[%s3 + $0x8] sm:$0xf]
  %v147 = vld [vmem:[%s3 + $0xc] sm:$0xf]
  %v148 = vld [vmem:[%s3 + $0x10] sm:$0xf]
  %v149 = vld [vmem:[%s3 + $0x14] sm:$0xf]
  %v150 = vld [vmem:[%s3 + $0x18] sm:$0xf]
  %v151 = vld [vmem:[%s3 + $0x1c] sm:$0xf]
  %v152 = vld [vmem:[%s3 + $0x20] sm:$0xf]
  %v153 = vld [vmem:[%s3 + $0x24] sm:$0xf]
  %v154 = vld [vmem:[%s3 + $0x28] sm:$0xf]
  %v155 = vld [vmem:[%s3 + $0x2c] sm:$0xf]
  %v156 = vld [vmem:[%s3 + $0x30] sm:$0xf]
  %v157 = vld [vmem:[%s3 + $0x34] sm:$0xf]
  %v158 = vld [vmem:[%s3 + $0x38] sm:$0xf]
  %v159 = vld [vmem:[%s3 + $0x3c] sm:$0xf]
  %v176 = vunpack.c.l.b16 %v144
  %v177 = vunpack.c.l.b16 %v145
  %v178 = vunpack.c.l.b16 %v146
  %v179 = vunpack.c.l.b16 %v147
  %v180 = vunpack.c.l.b16 %v148
  %v181 = vunpack.c.l.b16 %v149
  %v182 = vunpack.c.l.b16 %v150
  %v183 = vunpack.c.l.b16 %v151
  %v184 = vunpack.c.l.b16 %v152
  %v185 = vunpack.c.l.b16 %v153
  %v186 = vunpack.c.l.b16 %v154
  %v187 = vunpack.c.l.b16 %v155
  %v188 = vunpack.c.l.b16 %v156
  %v189 = vunpack.c.l.b16 %v157
  %v190 = vunpack.c.l.b16 %v158
  %v191 = vunpack.c.l.b16 %v159
  %v192 = vpack.c.b16 %v177, %v176
  %v193 = vpack.c.b16 %v179, %v178
  %v194 = vpack.c.b16 %v181, %v180
  %v195 = vpack.c.b16 %v183, %v182
  %v196 = vpack.c.b16 %v185, %v184
  %v197 = vpack.c.b16 %v187, %v186
  %v198 = vpack.c.b16 %v189, %v188
  %v199 = vpack.c.b16 %v191, %v190
  %208 = vmatprep.subr.bf16.mxu0 0
  %209 = vmatpush1.bf16.msra.mxu0 %v192
  %210 = vmatprep.subr.bf16.mxu0 0
  %211 = vmatpush1.bf16.msra.mxu0 %v193
  %212 = vmatprep.subr.bf16.mxu0 0
  %213 = vmatpush1.bf16.msra.mxu0 %v194
  %214 = vmatprep.subr.bf16.mxu0 0
  %215 = vmatpush1.bf16.msra.mxu0 %v195
  %216 = vmatprep.subr.bf16.mxu0 0
  %217 = vmatpush1.bf16.msra.mxu0 %v196
  %218 = vmatprep.subr.bf16.mxu0 0
  %219 = vmatpush1.bf16.msra.mxu0 %v197
  %220 = vmatprep.subr.bf16.mxu0 0
  %221 = vmatpush1.bf16.msra.mxu0 %v198
  %222 = vmatprep.subr.bf16.mxu0 0
  %223 = vmatpush1.bf16.msra.mxu0 %v199
  %224 = vmatprep.subr.bf16.mxu0 0
  %225 = vmatpush1.bf16.msra.mxu0 0
  %226 = vmatprep.subr.bf16.mxu0 0
  %227 = vmatpush1.bf16.msra.mxu0 0
  %228 = vmatprep.subr.bf16.mxu0 0
  %229 = vmatpush1.bf16.msra.mxu0 0
  %230 = vmatprep.subr.bf16.mxu0 0
  %231 = vmatpush1.bf16.msra.mxu0 0
  %232 = vmatprep.subr.bf16.mxu0 0
  %233 = vmatpush1.bf16.msra.mxu0 0
  %234 = vmatprep.subr.bf16.mxu0 0
  %235 = vmatpush1.bf16.msra.mxu0 0
  %236 = vmatprep.subr.bf16.mxu0 0
  %237 = vmatpush1.bf16.msra.mxu0 0
  %238 = vmatprep.subr.bf16.mxu0 0
  %239 = vmatpush1.bf16.msra.mxu0 0
  %240 = vmatprep.mubr.bf16.mxu0 0
  %241 = vmatmul.mubr.bf16.gmra.mrb[0].mxu0 %v143
  %v242 = vpop.f32.mrb[0].mxu0
  %v243 = vadd.f32 0.0, %v242
  %v244 = vpop.f32.mrb[0].mxu0
  %v245 = vpop.f32.mrb[0].mxu0
  %v246 = vadd.f32 0.0, %v245
  %v247 = vpop.f32.mrb[0].mxu0
  %248 = vdwg.mxu0
  %p249 = scmp.eq.s32.totalorder 0, 0
  // Predicated region
  $region22: #{feed_forward.1} parent=0 // pred_check
    %p250 = pneg %p249
  $region23: #{feed_forward.1} parent=0 // pred_check_branch
    %252 = sbr.rel (%p250) target = $region25
  $region24: #{feed_forward.1} parent=0 // pred_region
    %253 = vst [vmem:[#allocation2] sm:$0xff] %v243
    %254 = vst [vmem:[#allocation2 + $0x8] sm:$0xff] %v246
  $region25: #{feed_forward.1} parent=0 // pred_fallthru
    _
  %p255 = scmp.ne.s32.totalorder 0, 0
  // Predicated region
  $region26: #{feed_forward.1} parent=0 // pred_check
    %p256 = pneg %p255
  $region27: #{feed_forward.1} parent=0 // pred_check_branch
    %258 = sbr.rel (%p256) target = $region29
  $region28: #{feed_forward.1} parent=0 // pred_region
    %v259 = vld [vmem:[#allocation2] sm:$0xff]
    %v260 = vld [vmem:[#allocation2 + $0x8] sm:$0xff]
    %v261 = vadd.f32 %v259, %v243
    %v262 = vadd.f32 %v260, %v246
    %263 = vst [vmem:[#allocation2] sm:$0xff] %v261
    %264 = vst [vmem:[#allocation2 + $0x8] sm:$0xff] %v262
  $region29: #{feed_forward.1} parent=0 // pred_fallthru
    _
  // Predicated region
  $region30: #{feed_forward.1} parent=0 // pred_check
    %p265 = pneg %p249
  $region31: #{feed_forward.1} parent=0 // pred_check_branch
    %267 = sbr.rel (%p265) target = $region33
  $region32: #{feed_forward.1} parent=0 // pred_region
    %v268 = vld [vmem:[#allocation2] sm:$0xff]
    %v269 = vld [vmem:[#allocation2 + $0x8] sm:$0xff]
    %v270 = vld [vmem:[%s4] sm:$0x1]
    %v272 = vlaneseq
    %v273 = vshrl.u32 %v272, 7
    %v274 = vsub.s32 0, %v273
    %v275 = vrot.slane %v270, %v274
    %v277 = vadd.f32 %v268, %v275
    %v278 = vadd.f32 %v269, %v275
    %279 = vst [vmem:[%s5] sm:$0xff] %v277
    %280 = vst [vmem:[%s5 + $0x8] sm:$0xff] %v278
  $region33: #{feed_forward.1} parent=0 // pred_fallthru
    _
  // Predicated region
  $region34: #{feed_forward.1} parent=0 // pred_check
    _
  $region35: #{feed_forward.1} parent=0 // pred_check_branch
    %282 = sbr.rel (0) target = $region37
  $region36: #{feed_forward.1} parent=0 // pred_region
    _
  $region37: #{feed_forward.1} parent=0 // pred_fallthru
    _
  // Predicated region
  $region38: #{feed_forward.1} parent=0 // pred_check
    _
  $region39: #{feed_forward.1} parent=0 // pred_check_branch
    %284 = sbr.rel (0) target = $region41
  $region40: #{feed_forward.1} parent=0 // pred_region
    _
  $region41: #{feed_forward.1} parent=0 // pred_fallthru
    _

</llo_original>
